<compile_context>
chip_gen: v5e
topology: v5e:2x2
jax: 0.10.0
libtpu: 0.0.40
codegen_flags: <defaults>
</compile_context>

<pallas_src>
import functools

import jax
import jax.numpy as jnp
from jax.experimental import pallas as pl
from jax.experimental.pallas import tpu as pltpu

_MIB = 1024 * 1024


def _round_up(x, m):
    return (x + m - 1) // m * m


def _vmem_capacity_bytes():
    """Physical VMEM of the local chip; conservative (v7x-sized) fallback."""
    try:
        cap = int(getattr(pltpu.get_tpu_info(), "vmem_capacity_bytes", 0) or 0)
        if cap > 0:
            return cap
    except Exception:
        pass
    return 64 * _MIB


def _plan(M, H, L, vmem_cap, force_mode=None):
    """Pick weight-residency mode and the M row tile for this chip/problem."""
    Hp = _round_up(H, 128)
    Mp8 = _round_up(max(M, 1), 8)
    budget = (vmem_cap * 3) // 4                 # headroom below the hard limit

    # Conservatively count 2x for possible double buffering of each input.
    resident_bytes = 2 * L * Hp * Hp * 2 + 2 * L * Hp * 4   # full weight stack
    streamed_bytes = 2 * Hp * Hp * 2 + 2 * L * Hp * 4       # one layer's weight

    def act_bytes(tm):                           # x + out blocks, f32, 2x each
        return 4 * tm * Hp * 4

    def fits(tm, mode):
        wb = resident_bytes if mode == "resident" else streamed_bytes
        return wb + act_bytes(tm) <= budget

    mode = force_mode
    if mode is None:
        mode = "resident" if fits(min(256, Mp8), "resident") else "streamed"

    if mode == "resident":
        # Weights are DMA'd once for the whole grid, so a moderate tile is
        # enough; keep >= 2 m-tiles when M allows so the "parallel" m axis can
        # feed a second TensorCore (v7x megacore).
        tm = min(512, Mp8)
        if Mp8 >= 256 and Mp8 // tm < 2:
            tm = _round_up((Mp8 + 1) // 2, 8)
    else:
        # Weights are re-streamed from HBM once per m-tile, so arithmetic
        # intensity is exactly tm FLOP per weight byte.  Aim past the MXU/HBM
        # crossover: ~680 FLOP/B on v6e (tm ~1024), ~310 on v7x / ~240 on v5e
        # (tm ~512).
        tm = min(1024 if vmem_cap >= 128 * _MIB else 512, Mp8)

    while tm > 8 and not fits(tm, mode):
        tm = _round_up(tm // 2, 8)

    Mp = _round_up(max(M, 1), tm)
    return mode, tm, Mp, Hp


def _make_kernel(weights_resident):
    """One (m_tile, layer) grid step of the fused multiblock forward.

    The running activation lives in the output block itself: its block index
    (m, 0) is constant along the layer axis, so it stays VMEM-resident across
    all layers and is written back to HBM only when the m-tile changes.
    """

    def kernel(x_ref, w_ref, b_ref, o_ref):
        layer = pl.program_id(1)

        @pl.when(layer == 0)
        def _():
            o_ref[...] = x_ref[...]                       # seed the accumulator

        h = o_ref[...]                                    # (tm, Hp) f32
        w = w_ref[layer] if weights_resident else w_ref[...]   # (Hp, Hp) bf16
        y = jnp.dot(h.astype(jnp.bfloat16), w,            # bf16 MXU, f32 accum
                    preferred_element_type=jnp.float32)
        y = jax.nn.gelu(y + b_ref[layer])                  # f32 epilogue (tanh gelu)
        o_ref[...] = y + h                                 # residual

    return kernel


@functools.partial(jax.jit,
                   static_argnames=("mode", "tm", "Mp", "Hp", "vmem_limit"))
def _fused_forward(x2d, w_stack, b_stack, *, mode, tm, Mp, Hp, vmem_limit):
    """x2d: (M, H); w_stack: (L, Hp, Hp) bf16 (pre-padded); b_stack: (L, 1, Hp) f32."""
    M, H = x2d.shape
    L = w_stack.shape[0]
    num_m = Mp // tm
    resident = mode == "resident"

    xp = x2d.astype(jnp.float32)
    if (Mp, Hp) != (M, H):
        xp = jnp.pad(xp, ((0, Mp - M), (0, Hp - H)))

    if resident:
        # One DMA for the whole grid; kernel indexes w_ref[layer].
        w_spec = pl.BlockSpec((L, Hp, Hp), lambda m, l: (0, 0, 0))
        w_hbm_bytes = L * Hp * Hp * 2
    else:
        # Streamed one layer per grid step; re-fetched once per m-tile.
        w_spec = pl.BlockSpec((None, Hp, Hp), lambda m, l: (l, 0, 0))
        w_hbm_bytes = num_m * L * Hp * Hp * 2
    b_spec = pl.BlockSpec((L, 1, Hp), lambda m, l: (0, 0, 0))     # resident bias

    cost = pl.CostEstimate(
        flops=2 * L * Mp * Hp * Hp,
        transcendentals=L * Mp * Hp,
        bytes_accessed=2 * Mp * Hp * 4 + w_hbm_bytes + L * Hp * 4,
    )

    out = pl.pallas_call(
        _make_kernel(resident),
        out_shape=jax.ShapeDtypeStruct((Mp, Hp), jnp.float32),
        grid_spec=pltpu.PrefetchScalarGridSpec(
            num_scalar_prefetch=0,
            grid=(num_m, L),                               # layer axis innermost
            in_specs=[
                pl.BlockSpec((tm, Hp), lambda m, l: (m, 0)),   # activations
                w_spec,
                b_spec,
            ],
            out_specs=pl.BlockSpec((tm, Hp), lambda m, l: (m, 0)),
        ),
        compiler_params=pltpu.CompilerParams(
            dimension_semantics=("parallel", "arbitrary"),
            vmem_limit_bytes=vmem_limit,
        ),
        cost_estimate=cost,
        input_output_aliases={0: 0},                       # reuse activation HBM buffer
    )(xp, w_stack, b_stack)

    if (Mp, Hp) != (M, H):
        out = out[:M, :H]
    return out


def pack_layer_params(layer_params):
    """One-time packing of per-layer (W, b): stack, cast W to bf16, zero-pad H
    up to a lane-dense multiple of 128.  Hoisted out of the forward path so
    the pad/cast HBM copy is not re-materialized every call."""
    H = layer_params[0][0].shape[0]
    Hp = _round_up(H, 128)
    w = jnp.stack([jnp.asarray(w) for w, _ in layer_params]).astype(jnp.bfloat16)
    b = jnp.stack([jnp.asarray(b).reshape(1, -1) for _, b in layer_params]
                  ).astype(jnp.float32)
    if Hp != H:
        w = jnp.pad(w, ((0, 0), (0, Hp - H), (0, Hp - H)))
        b = jnp.pad(b, ((0, 0), (0, 0), (0, Hp - H)))
    return w, b, H


def wrapper_multiblock(x, packed_params, force_mode=None):
    """Pallas port of WrapperMultiblock.forward.

    x: (batch, seq, hidden); packed_params from pack_layer_params().
    The sequential layer loop + tuple-unwrap of the PyTorch module collapses
    into one fused kernel that keeps hidden_states resident in VMEM.
    """
    w_stack, b_stack, H = packed_params
    B, S, Hx = x.shape
    assert Hx == H
    M = B * S
    vmem_cap = _vmem_capacity_bytes()
    mode, tm, Mp, Hp = _plan(M, H, w_stack.shape[0], vmem_cap, force_mode)
    out2d = _fused_forward(
        x.reshape(M, H), w_stack, b_stack,
        mode=mode, tm=tm, Mp=Mp, Hp=Hp,
        vmem_limit=max(vmem_cap - 16 * _MIB, 32 * _MIB))
    return out2d.reshape(B, S, H)


def _reference(x, layer_params):
    """Pure-JAX reference with the same bf16-operand / f32-accumulate recipe."""
    h = x.astype(jnp.float32)
    for w, b in layer_params:
        y = jnp.einsum(
            "bsh,hk->bsk",
            h.astype(jnp.bfloat16), w.astype(jnp.bfloat16),
            preferred_element_type=jnp.float32,
        ) + b[0].astype(jnp.float32)
        h = jax.nn.gelu(y) + h
    return h


if __name__ == "__main__":
    key = jax.random.PRNGKey(0)
    B, S, H = 2, 8, 32
    num_layers = 3

    kx, *kws = jax.random.split(key, 1 + 2 * num_layers)
    x = jax.random.normal(kx, (B, S, H), dtype=jnp.float32)

    layer_params = []
    for i in range(num_layers):
        w = jax.random.normal(kws[2 * i], (H, H), dtype=jnp.float32) * 0.05
        b = jax.random.normal(kws[2 * i + 1], (1, H), dtype=jnp.float32) * 0.01
        layer_params.append((w, b))

    packed = pack_layer_params(layer_params)
    ref = _reference(x, layer_params)

    # Default plan: weight stack is small enough to be VMEM-resident.
    out = jax.block_until_ready(wrapper_multiblock(x, packed))
    assert out.shape == (B, S, H)
    assert jnp.allclose(out, ref, atol=1e-3, rtol=1e-3), "resident path mismatch"

    # Also exercise the streamed-weights path (what large-H models would use).
    out_s = jax.block_until_ready(
        wrapper_multiblock(x, packed, force_mode="streamed"))
    assert jnp.allclose(out_s, ref, atol=1e-3, rtol=1e-3), "streamed path mismatch"

    print("KERNEL_OK")
</pallas_src>

<mosaic_0001>
module attributes {stable_mosaic.version = 11 : i64} {
  func.func @kernel(%arg0: i32, %arg1: i32, %arg2: memref<16x128xf32, #tpu.memory_space<vmem>>, %arg3: memref<3x128x128xbf16, #tpu.memory_space<vmem>>, %arg4: memref<3x1x128xf32, #tpu.memory_space<vmem>>, %arg5: memref<16x128xf32, #tpu.memory_space<vmem>>) attributes {dimension_semantics = [#tpu.dimension_semantics<parallel>, #tpu.dimension_semantics<arbitrary>], iteration_bounds = array<i64: 1, 3>, scalar_prefetch = 0 : i64, scratch_operands = 0 : i64, tpu.core_type = #tpu.core_type<tc>, window_params = [{transform_indices = @transform_0, window_bounds = array<i64: 16, 128>}, {pipeline_mode = #tpu.pipeline_mode<synchronous>, transform_indices = @transform_1, window_bounds = array<i64: 3, 128, 128>}, {pipeline_mode = #tpu.pipeline_mode<synchronous>, transform_indices = @transform_2, window_bounds = array<i64: 3, 1, 128>}, {transform_indices = @transform_3, window_bounds = array<i64: 16, 128>}]} {
    %c0_i32 = arith.constant 0 : i32
    %0 = arith.cmpi eq, %arg1, %c0_i32 : i32
    %1 = arith.extui %0 : i1 to i32
    %c0_i32_0 = arith.constant 0 : i32
    %2 = arith.cmpi ne, %1, %c0_i32_0 : i32
    scf.if %2 {
      %c0_12 = arith.constant 0 : index
      %c0_13 = arith.constant 0 : index
      %29 = vector.load %arg2[%c0_12, %c0_13] : memref<16x128xf32, #tpu.memory_space<vmem>>, vector<16x128xf32>
      %c0_14 = arith.constant 0 : index
      %c0_15 = arith.constant 0 : index
      %30 = vector.load %arg5[%c0_14, %c0_15] : memref<16x128xf32, #tpu.memory_space<vmem>>, vector<16x128xf32>
      tpu.vector_store %arg5[%c0_14, %c0_15], %29 {strides = array<i32>} : memref<16x128xf32, #tpu.memory_space<vmem>>, vector<16x128xf32>,
    } else {
    }
    %c0 = arith.constant 0 : index
    %c0_1 = arith.constant 0 : index
    %3 = vector.load %arg5[%c0, %c0_1] : memref<16x128xf32, #tpu.memory_space<vmem>>, vector<16x128xf32>
    %4 = arith.index_cast %arg1 : i32 to index
    %c0_2 = arith.constant 0 : index
    %c0_3 = arith.constant 0 : index
    %5 = vector.load %arg3[%4, %c0_2, %c0_3] : memref<3x128x128xbf16, #tpu.memory_space<vmem>>, vector<1x128x128xbf16>
    %6 = vector.shape_cast %5 : vector<1x128x128xbf16> to vector<128x128xbf16>
    %7 = arith.truncf %3 : vector<16x128xf32> to vector<16x128xbf16>
    %cst = arith.constant dense<0.000000e+00> : vector<16x128xf32>
    %8 = tpu.matmul %7, %6, %cst {dimension_numbers = #tpu.dot_dimension_numbers<[1], [0], [0], [1], [0, 0, 1, 1], [], []>} : vector<16x128xbf16>, vector<128x128xbf16>, vector<16x128xf32> -> vector<16x128xf32>
    %9 = arith.index_cast %arg1 : i32 to index
    %c0_4 = arith.constant 0 : index
    %c0_5 = arith.constant 0 : index
    %10 = vector.load %arg4[%9, %c0_4, %c0_5] : memref<3x1x128xf32, #tpu.memory_space<vmem>>, vector<1x1x128xf32>
    %11 = vector.shape_cast %10 : vector<1x1x128xf32> to vector<1x128xf32>
    %12 = vector.broadcast %11 : vector<1x128xf32> to vector<16x128xf32>
    %13 = arith.addf %8, %12 : vector<16x128xf32>
    %14 = arith.mulf %13, %13 : vector<16x128xf32>
    %15 = arith.mulf %13, %14 : vector<16x128xf32>
    %cst_6 = arith.constant 4.471500e-02 : f32
    %16 = vector.broadcast %cst_6 : f32 to vector<16x128xf32>
    %17 = arith.mulf %16, %15 : vector<16x128xf32>
    %18 = arith.addf %13, %17 : vector<16x128xf32>
    %cst_7 = arith.constant 0.797884583 : f32
    %19 = vector.broadcast %cst_7 : f32 to vector<16x128xf32>
    %20 = arith.mulf %19, %18 : vector<16x128xf32>
    %21 = math.tanh %20 : vector<16x128xf32>
    %cst_8 = arith.constant 1.000000e+00 : f32
    %22 = vector.broadcast %cst_8 : f32 to vector<16x128xf32>
    %23 = arith.addf %22, %21 : vector<16x128xf32>
    %cst_9 = arith.constant 5.000000e-01 : f32
    %24 = vector.broadcast %cst_9 : f32 to vector<16x128xf32>
    %25 = arith.mulf %24, %23 : vector<16x128xf32>
    %26 = arith.mulf %13, %25 : vector<16x128xf32>
    %27 = arith.addf %26, %3 : vector<16x128xf32>
    %c0_10 = arith.constant 0 : index
    %c0_11 = arith.constant 0 : index
    %28 = vector.load %arg5[%c0_10, %c0_11] : memref<16x128xf32, #tpu.memory_space<vmem>>, vector<16x128xf32>
    tpu.vector_store %arg5[%c0_10, %c0_11], %27 {strides = array<i32>} : memref<16x128xf32, #tpu.memory_space<vmem>>, vector<16x128xf32>,
    return
  }
  func.func @transform_0(%arg0: i32, %arg1: i32) -> (i32, i32) {
    %c0_i32 = arith.constant 0 : i32
    %c0_i32_0 = arith.constant 0 : i32
    return %arg0, %c0_i32 : i32, i32
  }
  func.func @transform_1(%arg0: i32, %arg1: i32) -> (i32, i32, i32) {
    %c0_i32 = arith.constant 0 : i32
    %c0_i32_0 = arith.constant 0 : i32
    %c0_i32_1 = arith.constant 0 : i32
    %c0_i32_2 = arith.constant 0 : i32
    return %c0_i32, %c0_i32_0, %c0_i32_1 : i32, i32, i32
  }
  func.func @transform_2(%arg0: i32, %arg1: i32) -> (i32, i32, i32) {
    %c0_i32 = arith.constant 0 : i32
    %c0_i32_0 = arith.constant 0 : i32
    %c0_i32_1 = arith.constant 0 : i32
    %c0_i32_2 = arith.constant 0 : i32
    return %c0_i32, %c0_i32_0, %c0_i32_1 : i32, i32, i32
  }
  func.func @transform_3(%arg0: i32, %arg1: i32) -> (i32, i32) {
    %c0_i32 = arith.constant 0 : i32
    %c0_i32_0 = arith.constant 0 : i32
    return %arg0, %c0_i32 : i32, i32
  }
}

</mosaic_0001>

<llo_original>
// kernel: _fused_forward.1
$region0: #{_fused_forward.1}
  #allocation0 [shape = 'u32[]', space=smem, size = 0x4, offset = 0x4, fixed_abs, tag = 'smem constant byte address 0x4 - core index']
  #allocation1 [shape = 'u32[72,128]{1,0:T(1,128)}', space=vmem, size = 0x9000, scoped, tag = 'internal scratch']
  %s0 = inlined_call_operand.vmem [shape: f32[16,128], index: 0, kind: input, shape index: {}, may-alias: {0,3}]
  %s1 = inlined_call_operand.hbm [shape: bf16[3,128,128], index: 1, kind: input, shape index: {}]
  %s2 = inlined_call_operand.vmem [shape: f32[3,1,128], index: 2, kind: input, shape index: {}]
  %s3 = inlined_call_operand.vmem [shape: f32[16,128], index: 3, kind: output, shape index: {}, may-alias: {0,3}]
  %s4 = sld [smem:[#allocation0]]
  $region53: #{_fused_forward.1} parent=0
    _
  %s6 = ssub.s32 1, %s4
  %s7 = scalar_select 0, %s6, %s4
  $region1: #{_fused_forward.1} parent=0
    #allocation2 [shape = 'u8[98304]{0}', space=vmem, size = 0x18000, scoped, tag = 'input window, operand 1, single buffered']
    #allocation3 [shape = 's32[2]{0}', space=sflag, size = 0x8, scoped, tag = 'scoped memory for _fused_forward.1']
    %8 = vsyncpa [#allocation3], 0
    loop: start=0, step=1, limit=5
    $region2: #{_fused_forward.1} parent=1 // loop_pre_header
      _
    $region3: #{_fused_forward.1} parent=1 // loop_header
      %s10 = sphi 0, %s14
      %p11 = scmp.ge.s32.totalorder %s10, 5
      %s17 = sphi 0, %s29
      %s18 = sphi 0, %s25
      %s19 = sphi 0, %s17
      %s20 = sphi 0, %s18
      %s21 = sphi 0, %s19
      %s22 = sphi 0, %s20
      %s32 = sphi 0, %s34
      %s35 = sphi 0, %s32
      %s36 = sphi 0, %s35
      %s52 = sphi 0, %s36
      %s56 = sphi 0, %s56
      %s58 = sphi 0, %s56
      %s59 = sphi 0, %s58
      %s73 = sphi 0, %s59
      %s77 = sphi 0, %s77
      %s79 = sphi 0, %s77
      %s80 = sphi 0, %s79
      %s94 = sphi 0, %s80
      %s100 = sphi 0, %s102
      %s103 = sphi 0, %s100
      %s104 = sphi 0, %s103
      %s120 = sphi 0, %s104
    $region4: #{_fused_forward.1} parent=1 // loop_header_branch
      %13 = sbr.rel (%p11) target = $region8
    $region5: #{_fused_forward.1} parent=1 // loop_body
      %s15 = ssub.s32 %s10, 1
      %s16 = ssub.s32 %s10, 2
      %s23 = sadd.s32 1, %s18
      %p24 = scmp.ge.s32.totalorder %s23, 3
      %s25 = scalar_select %p24, 0, %s23
      %s26 = sadd.s32 1, %s17
      %s27 = scalar_select %p24, %s26, %s17
      %p28 = scmp.ge.s32.totalorder %s27, 1
      %s29 = scalar_select %p28, 0, %s27
      %s30 = ssub.s32 %s17, %s29
      %p31 = scmp.eq.s32.totalorder %s30, 0
      %s33 = sadd.s32 %s32, 1
      %s34 = scalar_select %p31, %s32, %s33
      %p37 = pneg %p31
      %p38 = scmp.eq.s32.totalorder %s10, 2
      %p39 = por %p37, %p38
      %p40 = scmp.ne.s32.totalorder %s32, %s35
      %p41 = scmp.eq.s32.totalorder %s10, 0
      %p42 = por %p40, %p41
      %p43 = scmp.ne.s32.totalorder %s32, %s35
      %p44 = scmp.eq.s32.totalorder %s15, 2
      %p45 = por %p43, %p44
      %p46 = scmp.ne.s32.totalorder %s35, %s36
      %p47 = scmp.eq.s32.totalorder %s15, 0
      %p48 = por %p46, %p47
      %p49 = scmp.ne.s32.totalorder %s35, %s36
      %p50 = scmp.eq.s32.totalorder %s16, 2
      %p51 = por %p49, %p50
      %p53 = scmp.ne.s32.totalorder %s36, %s52
      %p54 = scmp.eq.s32.totalorder %s16, 0
      %p55 = por %p53, %p54
      %s57 = sadd.s32 %s56, 1
      %p60 = scmp.eq.s32.totalorder %s10, 2
      %p61 = scmp.ne.s32.totalorder %s56, %s58
      %p62 = scmp.eq.s32.totalorder %s10, 0
      %p63 = por %p61, %p62
      %p64 = scmp.ne.s32.totalorder %s56, %s58
      %p65 = scmp.eq.s32.totalorder %s15, 2
      %p66 = por %p64, %p65
      %p67 = scmp.ne.s32.totalorder %s58, %s59
      %p68 = scmp.eq.s32.totalorder %s15, 0
      %p69 = por %p67, %p68
      %p70 = scmp.ne.s32.totalorder %s58, %s59
      %p71 = scmp.eq.s32.totalorder %s16, 2
      %p72 = por %p70, %p71
      %p74 = scmp.ne.s32.totalorder %s59, %s73
      %p75 = scmp.eq.s32.totalorder %s16, 0
      %p76 = por %p74, %p75
      %s78 = sadd.s32 %s77, 1
      %p81 = scmp.eq.s32.totalorder %s10, 2
      %p82 = scmp.ne.s32.totalorder %s77, %s79
      %p83 = scmp.eq.s32.totalorder %s10, 0
      %p84 = por %p82, %p83
      %p85 = scmp.ne.s32.totalorder %s77, %s79
      %p86 = scmp.eq.s32.totalorder %s15, 2
      %p87 = por %p85, %p86
      %p88 = scmp.ne.s32.totalorder %s79, %s80
      %p89 = scmp.eq.s32.totalorder %s15, 0
      %p90 = por %p88, %p89
      %p91 = scmp.ne.s32.totalorder %s79, %s80
      %p92 = scmp.eq.s32.totalorder %s16, 2
      %p93 = por %p91, %p92
      %p95 = scmp.ne.s32.totalorder %s80, %s94
      %p96 = scmp.eq.s32.totalorder %s16, 0
      %p97 = por %p95, %p96
      %s98 = ssub.s32 %s17, %s29
      %p99 = scmp.eq.s32.totalorder %s98, 0
      %s101 = sadd.s32 %s100, 1
      %s102 = scalar_select %p99, %s100, %s101
      %p105 = pneg %p99
      %p106 = scmp.eq.s32.totalorder %s10, 2
      %p107 = por %p105, %p106
      %p108 = scmp.ne.s32.totalorder %s100, %s103
      %p109 = scmp.eq.s32.totalorder %s10, 0
      %p110 = por %p108, %p109
      %p111 = scmp.ne.s32.totalorder %s100, %s103
      %p112 = scmp.eq.s32.totalorder %s15, 2
      %p113 = por %p111, %p112
      %p114 = scmp.ne.s32.totalorder %s103, %s104
      %p115 = scmp.eq.s32.totalorder %s15, 0
      %p116 = por %p114, %p115
      %p117 = scmp.ne.s32.totalorder %s103, %s104
      %p118 = scmp.eq.s32.totalorder %s16, 2
      %p119 = por %p117, %p118
      %p121 = scmp.ne.s32.totalorder %s104, %s120
      %p122 = scmp.eq.s32.totalorder %s16, 0
      %p123 = por %p121, %p122
      %p124 = scmp.le.s32.totalorder 1, %s10
      %p125 = scmp.lt.s32.totalorder %s10, 4
      %p126 = pnand %p124, %p125
      %p127 = pneg %p126
      // Predicated region
      $region9: #{_fused_forward.1} parent=5 // pred_check
        _
      $region10: #{_fused_forward.1} parent=5 // pred_check_branch
        %129 = sbr.rel (%p126) target = $region12
      $region11: #{_fused_forward.1} parent=5 // pred_region
        %s130 = ssub.s32 %s10, 1
        // Predicated region
        $region13: #{_fused_forward.1} parent=11 // pred_check
          %p131 = pneg %p48
        $region14: #{_fused_forward.1} parent=11 // pred_check_branch
          %133 = sbr.rel (%p131) target = $region16
        $region15: #{_fused_forward.1} parent=11 // pred_region
          %s134 = smul.u32 2, %s19
          %p135 = scmp.lt.s32.totalorder %s134, 1
          %s136 = scalar_select %p135, %s134, 1
          %s137 = smul.addr %s136, 8
          %s138 = scalar_lea.vmem %s0, %s137
          %s139 = smul.u32 2, %s19
        $region16: #{_fused_forward.1} parent=11 // pred_fallthru
          _
        // Predicated region
        $region17: #{_fused_forward.1} parent=11 // pred_check
          %p140 = pneg %p69
        $region18: #{_fused_forward.1} parent=11 // pred_check_branch
          %142 = sbr.rel (%p140) target = $region20
        $region19: #{_fused_forward.1} parent=11 // pred_region
          %144 = vsyncadd [#allocation3], 0
          %s145 = sshll.u32 %s1, 4
          %s146 = int_to_ptr.hbm [resolvable:$true] %s145
          %s147 = sshll.u32 [#allocation2], 4
          %s148 = int_to_ptr.vmem [resolvable:$true] %s147
          %153 = dma.hbm_to_vmem [thread:$0]  %s146, 3072, %s148, [#allocation3], 64, 64, 4
        $region20: #{_fused_forward.1} parent=11 // pred_fallthru
          _
        // Predicated region
        $region21: #{_fused_forward.1} parent=11 // pred_check
          %p154 = pneg %p90
        $region22: #{_fused_forward.1} parent=11 // pred_check_branch
          %156 = sbr.rel (%p154) target = $region24
        $region23: #{_fused_forward.1} parent=11 // pred_region
          _
        $region24: #{_fused_forward.1} parent=11 // pred_fallthru
          _
      $region12: #{_fused_forward.1} parent=5 // pred_fallthru
        _
      %p157 = scmp.lt.s32.totalorder %s10, 3
      // Predicated region
      $region25: #{_fused_forward.1} parent=5 // pred_check
        %p158 = pneg %p157
      $region26: #{_fused_forward.1} parent=5 // pred_check_branch
        %160 = sbr.rel (%p158) target = $region28
      $region27: #{_fused_forward.1} parent=5 // pred_region
        _
      $region28: #{_fused_forward.1} parent=5 // pred_fallthru
        _
      %p161 = scmp.le.s32.totalorder 1, %s10
      %p162 = scmp.lt.s32.totalorder %s10, 4
      %p163 = pnand %p161, %p162
      %p164 = pneg %p163
      // Predicated region
      $region29: #{_fused_forward.1} parent=5 // pred_check
        _
      $region30: #{_fused_forward.1} parent=5 // pred_check_branch
        %166 = sbr.rel (%p163) target = $region32
      $region31: #{_fused_forward.1} parent=5 // pred_region
        %s167 = ssub.s32 %s10, 1
        // Predicated region
        $region33: #{_fused_forward.1} parent=31 // pred_check
          %p168 = pneg %p69
        $region34: #{_fused_forward.1} parent=31 // pred_check_branch
          %170 = sbr.rel (%p168) target = $region36
        $region35: #{_fused_forward.1} parent=31 // pred_region
          %172 = dma.done [#allocation3], 3072
        $region36: #{_fused_forward.1} parent=31 // pred_fallthru
          _
        %s173 = smul.u32 2, %s19
        %p174 = scmp.lt.s32.totalorder %s173, 1
        %s175 = scalar_select %p174, %s173, 1
        %s176 = smul.addr %s175, 8
        %s177 = scalar_lea.vmem %s0, %s176
        %p178 = pneg %p48
        %p179 = pneg %p45
        %p180 = pneg %p69
        %p181 = pneg %p66
        %p182 = pneg %p90
        %p183 = pneg %p87
        %p184 = pneg %p116
        %p185 = pneg %p113
        %s186 = smul.u32 2, %s19
        %p187 = scmp.lt.s32.totalorder %s186, 1
        %s188 = scalar_select %p187, %s186, 1
        %s189 = smul.addr %s188, 8
        %s190 = scalar_lea.vmem %s3, %s189
        %s191 = smul.u32 2, %s19
        %p192 = scmp.lt.s32.totalorder %s191, 1
        %s193 = scalar_select %p192, %s191, 1
        %s194 = smul.addr %s193, 8
        %s195 = scalar_lea.vmem %s0, %s194
        %s196 = smul.u32 2, %s19
        %s197 = smul.u32 2, %s19
        %p198 = scmp.lt.s32.totalorder %s197, 1
        %s199 = scalar_select %p198, %s197, 1
        %s200 = smul.addr %s199, 8
        %s201 = scalar_lea.vmem %s3, %s200
        %s202 = smul.u32 2, %s19
        %p203 = scmp.eq.s32.totalorder %s20, 0
        // Predicated region
        $region37: #{_fused_forward.1} parent=31 // pred_check
          %p204 = pneg %p203
        $region38: #{_fused_forward.1} parent=31 // pred_check_branch
          %206 = sbr.rel (%p204) target = $region40
        $region39: #{_fused_forward.1} parent=31 // pred_region
          %v207 = vld [vmem:[%s195] sm:$0xff]
          %v208 = vld [vmem:[%s195 + $0x8] sm:$0xff]
          %209 = vst [vmem:[%s201] sm:$0xff] %v207
          %210 = vst [vmem:[%s201 + $0x8] sm:$0xff] %v208
        $region40: #{_fused_forward.1} parent=31 // pred_fallthru
          _
        %v211 = vld [vmem:[%s201] sm:$0xff]
        %v212 = vld [vmem:[%s201 + $0x8] sm:$0xff]
        %s213 = smul.u32 %s20, 16
        %s214 = smul.addr %s213, 4
        %s215 = scalar_lea.vmem [#allocation2], %s214
        %v216 = vld [vmem:[%s215] sm:$0xf]
        %v217 = vld [vmem:[%s215 + $0x4] sm:$0xf]
        %v218 = vld [vmem:[%s215 + $0x8] sm:$0xf]
        %v219 = vld [vmem:[%s215 + $0xc] sm:$0xf]
        %v220 = vld [vmem:[%s215 + $0x10] sm:$0xf]
        %v221 = vld [vmem:[%s215 + $0x14] sm:$0xf]
        %v222 = vld [vmem:[%s215 + $0x18] sm:$0xf]
        %v223 = vld [vmem:[%s215 + $0x1c] sm:$0xf]
        %v224 = vld [vmem:[%s215 + $0x20] sm:$0xf]
        %v225 = vld [vmem:[%s215 + $0x24] sm:$0xf]
        %v226 = vld [vmem:[%s215 + $0x28] sm:$0xf]
        %v227 = vld [vmem:[%s215 + $0x2c] sm:$0xf]
        %v228 = vld [vmem:[%s215 + $0x30] sm:$0xf]
        %v229 = vld [vmem:[%s215 + $0x34] sm:$0xf]
        %v230 = vld [vmem:[%s215 + $0x38] sm:$0xf]
        %v231 = vld [vmem:[%s215 + $0x3c] sm:$0xf]
        %v232 = vpack.c.bf16 %v212, %v211
        %s233 = scalar_lea.vmem %s2, %s20
        %v234 = vld [vmem:[%s233] sm:$0x1]
        %v236 = vperm.slane %v234, 0
        %v254 = vunpack.c.l.b16 %v216
        %v255 = vunpack.c.l.b16 %v217
        %v256 = vunpack.c.l.b16 %v218
        %v257 = vunpack.c.l.b16 %v219
        %v258 = vunpack.c.l.b16 %v220
        %v259 = vunpack.c.l.b16 %v221
        %v260 = vunpack.c.l.b16 %v222
        %v261 = vunpack.c.l.b16 %v223
        %v262 = vunpack.c.l.b16 %v224
        %v263 = vunpack.c.l.b16 %v225
        %v264 = vunpack.c.l.b16 %v226
        %v265 = vunpack.c.l.b16 %v227
        %v266 = vunpack.c.l.b16 %v228
        %v267 = vunpack.c.l.b16 %v229
        %v268 = vunpack.c.l.b16 %v230
        %v269 = vunpack.c.l.b16 %v231
        %v270 = vpack.c.b16 %v255, %v254
        %v271 = vpack.c.b16 %v257, %v256
        %v272 = vpack.c.b16 %v259, %v258
        %v273 = vpack.c.b16 %v261, %v260
        %v274 = vpack.c.b16 %v263, %v262
        %v275 = vpack.c.b16 %v265, %v264
        %v276 = vpack.c.b16 %v267, %v266
        %v277 = vpack.c.b16 %v269, %v268
        %286 = vmatpush.bf16.msra.mxu0 %v277
        %287 = vmatpush.bf16.msra.mxu0 %v276
        %288 = vmatpush.bf16.msra.mxu0 %v275
        %289 = vmatpush.bf16.msra.mxu0 %v274
        %290 = vmatpush.bf16.msra.mxu0 %v273
        %291 = vmatpush.bf16.msra.mxu0 %v272
        %292 = vmatpush.bf16.msra.mxu0 %v271
        %293 = vmatpush.bf16.msra.mxu0 %v270
        %294 = vmatmul.bf16.gmra.mxu0 %v232
        %v295 = vpop.f32.mrf.mxu0
        %v296 = vadd.f32 %v236, %v295
        %v297 = vpop.f32.mrf.mxu0
        %v298 = vadd.f32 %v236, %v297
        %299 = vdwg.mxu0
        %v300 = vmul.f32 %v296, %v296
        %v301 = vmul.f32 %v298, %v298
        %v302 = vmul.f32 %v296, %v300
        %v303 = vmul.f32 %v298, %v301
        %v304 = vmul.f32 %v302, 0.044715
        %v305 = vmul.f32 %v303, 0.044715
        %v306 = vadd.f32 %v296, %v304
        %v307 = vadd.f32 %v298, %v305
        %v308 = vmul.f32 %v306, 0.7978846
        %v309 = vmul.f32 %v307, 0.7978846
        %v310 = vtanh.pop %v308
        %v311 = vtanh.pop %v309
        %v312 = vadd.f32 %v310, 1.0
        %v313 = vadd.f32 %v311, 1.0
        %v314 = vmul.f32 %v312, 0.5
        %v315 = vmul.f32 %v313, 0.5
        %v316 = vmul.f32 %v296, %v314
        %v317 = vmul.f32 %v298, %v315
        %v318 = vadd.f32 %v316, %v211
        %v319 = vadd.f32 %v317, %v212
        %320 = vst [vmem:[%s201] sm:$0xff] %v318
        %321 = vst [vmem:[%s201 + $0x8] sm:$0xff] %v319
        %s322 = smul.u32 2, %s19
        %p323 = scmp.lt.s32.totalorder %s322, 1
        %s324 = scalar_select %p323, %s322, 1
        %s325 = smul.addr %s324, 8
        %s326 = scalar_lea.vmem %s3, %s325
        // Predicated region
        $region41: #{_fused_forward.1} parent=31 // pred_check
          %p327 = pneg %p113
        $region42: #{_fused_forward.1} parent=31 // pred_check_branch
          %329 = sbr.rel (%p327) target = $region44
        $region43: #{_fused_forward.1} parent=31 // pred_region
          %s330 = smul.u32 2, %s19
        $region44: #{_fused_forward.1} parent=31 // pred_fallthru
          _
        // Predicated region
        $region45: #{_fused_forward.1} parent=31 // pred_check
          %p331 = pneg %p113
        $region46: #{_fused_forward.1} parent=31 // pred_check_branch
          %333 = sbr.rel (%p331) target = $region48
        $region47: #{_fused_forward.1} parent=31 // pred_region
          %s334 = smul.u32 2, %s19
          %p335 = scmp.lt.s32.totalorder %s334, 1
          %s336 = scalar_select %p335, %s334, 1
          %s337 = smul.addr %s336, 8
          %s338 = scalar_lea.vmem %s3, %s337
        $region48: #{_fused_forward.1} parent=31 // pred_fallthru
          _
      $region32: #{_fused_forward.1} parent=5 // pred_fallthru
        _
      %p339 = scmp.le.s32.totalorder 2, %s10
      // Predicated region
      $region49: #{_fused_forward.1} parent=5 // pred_check
        %p340 = pneg %p339
      $region50: #{_fused_forward.1} parent=5 // pred_check_branch
        %342 = sbr.rel (%p340) target = $region52
      $region51: #{_fused_forward.1} parent=5 // pred_region
        %s343 = ssub.s32 %s10, 2
      $region52: #{_fused_forward.1} parent=5 // pred_fallthru
        _
    $region6: #{_fused_forward.1} parent=1 // loop_footer
      %s14 = sadd.s32 1, %s10
    $region7: #{_fused_forward.1} parent=1 // loop_footer_branch
      %9 = sbr.rel target = $region3
    $region8: #{_fused_forward.1} parent=1 // loop_exit
      _
    %344 = vsyncpa [#allocation3], 1
    %s345 = scalar_lea.sflag [#allocation3], 1
    %346 = vsyncpa %s345, 1

</llo_original>
